<compile_context>
chip_gen: v6e
topology: v6e:2x2x1
jax: 0.10.0
libtpu: 0.0.40
codegen_flags: <defaults>
</compile_context>

<pallas_src>
import jax
import jax.numpy as jnp
from jax.experimental import pallas as pl
from jax.experimental.pallas import tpu as pltpu


def _round_up(n: int, m: int) -> int:
    return ((n + m - 1) // m) * m


def _mlp_kernel(x_ref, w1_ref, b1_ref, w2_ref, b2_ref, w3_ref, b3_ref, o_ref):
    """One (TB, in_dim) batch tile through the fused 3-layer MLP."""
    w1 = w1_ref[...]
    w2 = w2_ref[...]
    w3 = w3_ref[...]

    # Layer 1: Linear + ReLU. The cast of the streamed activations to the MXU
    # operand dtype is a no-op for f32 weights and a cheap VPU cast for bf16.
    # Accumulation, bias add and ReLU stay f32 (v5e has no bf16 VPU).
    h = jnp.dot(x_ref[...].astype(w1.dtype), w1, preferred_element_type=jnp.float32)
    h = jnp.maximum(h + b1_ref[...], 0.0)

    # Layer 2: Linear + ReLU
    h = jnp.dot(h.astype(w2.dtype), w2, preferred_element_type=jnp.float32)
    h = jnp.maximum(h + b2_ref[...], 0.0)

    # Layer 3: output head, no final activation (default final_activation=None).
    out = jnp.dot(h.astype(w3.dtype), w3, preferred_element_type=jnp.float32)
    o_ref[...] = (out + b3_ref[...]).astype(o_ref.dtype)


def _choose_batch_tile(batch: int, block_batch: int, sublane: int) -> int:
    """Pick a batch-tile size.

    Rules:
      * tile rows are a multiple of `sublane` OR equal to the full batch
        (both satisfy the TPU block-shape constraint),
      * never pad / copy the activations,
      * keep >= 2 grid steps whenever possible so the "parallel" batch axis
        shards across v7x's two TensorCores.
    """
    if batch <= sublane:
        return batch                      # single full-array block (legal as-is)
    if batch <= 2 * block_batch:
        half = _round_up(pl.cdiv(batch, 2), sublane)
        if half < batch:
            return half                   # 2 grid steps, boundary block masked
        return batch                      # cannot split cleanly -> full block
    return block_batch


def mlp_forward(x, params, *, block_batch: int = 2048, matmul_dtype=None,
                out_dtype=jnp.float32):
    """Run the fused MLP Pallas kernel.

    Args:
      x: (batch, input_dim) activations (streamed in their native dtype).
      params: dict with w1 (in, h1), b1 (h1,), w2 (h1, h2), b2 (h2,),
              w3 (h2, out), b3 (out,) — weights already in (in, out) layout.
      block_batch: max batch-tile rows per grid step.
      matmul_dtype: dtype of the MXU operands (None = keep the weights' dtype,
                    i.e. bit-exact f32; jnp.bfloat16 halves resident weight
                    bytes and doubles MXU rate — an accuracy trade-off).
      out_dtype: output dtype (bf16 halves the dominant HBM write stream on
                 v5e if downstream tolerates it; default f32 = exact).
    Returns:
      (batch, output_dim) array of dtype `out_dtype`.
    """
    w1, b1 = params["w1"], params["b1"]
    w2, b2 = params["w2"], params["b2"]
    w3, b3 = params["w3"], params["b3"]

    batch, in_dim = x.shape
    h1 = w1.shape[1]
    h2 = w2.shape[1]
    out_dim = w3.shape[1]

    if matmul_dtype is None:
        matmul_dtype = w1.dtype

    # ---- batch tiling ---------------------------------------------------------
    # Sublane multiple depends on the streamed activation dtype (f32: 8, bf16: 16,
    # int8/fp8: 32).
    x_item = jnp.dtype(x.dtype).itemsize
    sublane = {4: 8, 2: 16, 1: 32}.get(x_item, 8)
    tb = _choose_batch_tile(batch, block_batch, sublane)
    grid = (pl.cdiv(batch, tb),)

    # ---- parameter prep (tiny, one-time) --------------------------------------
    # Weights optionally cast to the MXU operand dtype; biases stay f32 and are
    # laid out as (1, F) rows so the in-kernel bias add is a plain 2-D broadcast.
    # Hidden widths are NOT padded: the kernel is HBM-bound, not MXU-bound.
    w1c = w1.astype(matmul_dtype)
    w2c = w2.astype(matmul_dtype)
    w3c = w3.astype(matmul_dtype)
    b1r = b1.reshape(1, h1).astype(jnp.float32)
    b2r = b2.reshape(1, h2).astype(jnp.float32)
    b3r = b3.reshape(1, out_dim).astype(jnp.float32)

    def tile_spec(last_dim):
        # Batch-tiled operand: block index advances with the grid step.
        return pl.BlockSpec((tb, last_dim), lambda i: (i, 0))

    def resident_spec(shape):
        # Weights / biases: same block every step -> DMA'd once, stay in VMEM.
        return pl.BlockSpec(shape, lambda i: (0, 0))

    # ---- VMEM budget: ~2x the real footprint, clamped, well under v7x's 64 MiB -
    w_bytes = jnp.dtype(matmul_dtype).itemsize
    o_bytes = jnp.dtype(out_dtype).itemsize
    weight_footprint = ((w1c.size + w2c.size + w3c.size) * w_bytes
                        + (b1r.size + b2r.size + b3r.size) * 4)
    stream_footprint = 2 * tb * (in_dim * x_item + out_dim * o_bytes)   # double-buffered
    interm_footprint = 3 * tb * max(h1, h2) * 4                          # in-kernel temps
    vmem_limit = int(min(max(2 * (weight_footprint + stream_footprint + interm_footprint),
                             8 << 20), 32 << 20))

    # ---- advisory cost estimate for XLA's scheduler ----------------------------
    flops = 2 * batch * (in_dim * h1 + h1 * h2 + h2 * out_dim)
    bytes_accessed = (batch * in_dim * x_item
                      + batch * out_dim * o_bytes
                      + weight_footprint)
    cost = pl.CostEstimate(flops=flops, transcendentals=0,
                           bytes_accessed=bytes_accessed)

    out = pl.pallas_call(
        _mlp_kernel,
        out_shape=jax.ShapeDtypeStruct((batch, out_dim), out_dtype),
        grid=grid,
        in_specs=[
            tile_spec(in_dim),
            resident_spec(w1c.shape),
            resident_spec(b1r.shape),
            resident_spec(w2c.shape),
            resident_spec(b2r.shape),
            resident_spec(w3c.shape),
            resident_spec(b3r.shape),
        ],
        out_specs=tile_spec(out_dim),
        compiler_params=pltpu.CompilerParams(
            dimension_semantics=("parallel",),   # megacore sharding on v7x
            vmem_limit_bytes=vmem_limit,
        ),
        cost_estimate=cost,
    )(x, w1c, b1r, w2c, b2r, w3c, b3r)

    return out


def init_mlp_params(key, input_dim, hidden, output_dim):
    """Deterministic nn.Linear-style init (uniform(-1/sqrt(fan_in), 1/sqrt(fan_in)))."""
    dims = [input_dim] + list(hidden) + [output_dim]
    params = {}
    for i in range(len(dims) - 1):
        key, kw, kb = jax.random.split(key, 3)
        fan_in, fan_out = dims[i], dims[i + 1]
        bound = 1.0 / jnp.sqrt(float(fan_in))
        # stored as (in, out) so the kernel does x @ W
        params[f"w{i + 1}"] = jax.random.uniform(
            kw, (fan_in, fan_out), jnp.float32, minval=-bound, maxval=bound
        )
        params[f"b{i + 1}"] = jax.random.uniform(
            kb, (fan_out,), jnp.float32, minval=-bound, maxval=bound
        )
    return params


def mlp_reference(x, params):
    """Pure-JAX reference mirroring the PyTorch forward."""
    h = jnp.maximum(x @ params["w1"] + params["b1"], 0.0)
    h = jnp.maximum(h @ params["w2"] + params["b2"], 0.0)
    return h @ params["w3"] + params["b3"]


if __name__ == "__main__":
    key = jax.random.PRNGKey(0)
    key, kx, kx2, kp = jax.random.split(key, 4)

    input_dim = 16
    hidden = [64, 64]          # default network_arch
    output_dim = 8
    params = init_mlp_params(kp, input_dim, hidden, output_dim)

    # --- tiny smoke test (single full-array block, grid=(1,)) -------------------
    batch = 4
    x = jax.random.normal(kx, (batch, input_dim), dtype=jnp.float32)
    ref = mlp_reference(x, params)

    # Exact-semantics path (f32 MXU operands) — matches the PyTorch forward.
    out_f32 = jax.block_until_ready(mlp_forward(x, params))
    assert out_f32.shape == (batch, output_dim), out_f32.shape
    assert jnp.allclose(out_f32, ref, atol=1e-5, rtol=1e-5), (
        float(jnp.max(jnp.abs(out_f32 - ref)))
    )

    # Throughput path (bf16 MXU operands, f32 accumulation) — looser tolerance.
    out_bf16 = jax.block_until_ready(
        mlp_forward(x, params, matmul_dtype=jnp.bfloat16))
    assert out_bf16.shape == (batch, output_dim), out_bf16.shape
    assert jnp.allclose(out_bf16, ref, atol=5e-2, rtol=5e-2), (
        float(jnp.max(jnp.abs(out_bf16 - ref)))
    )

    # --- multi-tile test: 2 grid steps + masked OOB boundary block --------------
    batch2 = 300               # tb = 152 -> grid=(2,), last block partially OOB
    x2 = jax.random.normal(kx2, (batch2, input_dim), dtype=jnp.float32)
    ref2 = mlp_reference(x2, params)
    out2 = jax.block_until_ready(mlp_forward(x2, params))
    assert out2.shape == (batch2, output_dim), out2.shape
    assert jnp.allclose(out2, ref2, atol=1e-5, rtol=1e-5), (
        float(jnp.max(jnp.abs(out2 - ref2)))
    )

    print("KERNEL_OK")
</pallas_src>

<mosaic_0001>
module attributes {stable_mosaic.version = 11 : i64} {
  func.func @_mlp_kernel(%arg0: i32, %arg1: memref<4x16xf32, #tpu.memory_space<vmem>>, %arg2: memref<16x64xf32, #tpu.memory_space<vmem>>, %arg3: memref<1x64xf32, #tpu.memory_space<vmem>>, %arg4: memref<64x64xf32, #tpu.memory_space<vmem>>, %arg5: memref<1x64xf32, #tpu.memory_space<vmem>>, %arg6: memref<64x8xf32, #tpu.memory_space<vmem>>, %arg7: memref<1x8xf32, #tpu.memory_space<vmem>>, %arg8: memref<4x8xf32, #tpu.memory_space<vmem>>) attributes {dimension_semantics = [#tpu.dimension_semantics<parallel>], iteration_bounds = array<i64: 1>, scalar_prefetch = 0 : i64, scratch_operands = 0 : i64, tpu.core_type = #tpu.core_type<tc>, window_params = [{transform_indices = @transform_0, window_bounds = array<i64: 4, 16>}, {pipeline_mode = #tpu.pipeline_mode<synchronous>, transform_indices = @transform_1, window_bounds = array<i64: 16, 64>}, {pipeline_mode = #tpu.pipeline_mode<synchronous>, transform_indices = @transform_2, window_bounds = array<i64: 1, 64>}, {pipeline_mode = #tpu.pipeline_mode<synchronous>, transform_indices = @transform_3, window_bounds = array<i64: 64, 64>}, {pipeline_mode = #tpu.pipeline_mode<synchronous>, transform_indices = @transform_4, window_bounds = array<i64: 1, 64>}, {pipeline_mode = #tpu.pipeline_mode<synchronous>, transform_indices = @transform_5, window_bounds = array<i64: 64, 8>}, {pipeline_mode = #tpu.pipeline_mode<synchronous>, transform_indices = @transform_6, window_bounds = array<i64: 1, 8>}, {transform_indices = @transform_7, window_bounds = array<i64: 4, 8>}]} {
    %c0 = arith.constant 0 : index
    %c0_0 = arith.constant 0 : index
    %0 = vector.load %arg2[%c0, %c0_0] : memref<16x64xf32, #tpu.memory_space<vmem>>, vector<16x64xf32>
    %c0_1 = arith.constant 0 : index
    %c0_2 = arith.constant 0 : index
    %1 = vector.load %arg4[%c0_1, %c0_2] : memref<64x64xf32, #tpu.memory_space<vmem>>, vector<64x64xf32>
    %c0_3 = arith.constant 0 : index
    %c0_4 = arith.constant 0 : index
    %2 = vector.load %arg6[%c0_3, %c0_4] : memref<64x8xf32, #tpu.memory_space<vmem>>, vector<64x8xf32>
    %c0_5 = arith.constant 0 : index
    %c0_6 = arith.constant 0 : index
    %3 = vector.load %arg1[%c0_5, %c0_6] : memref<4x16xf32, #tpu.memory_space<vmem>>, vector<4x16xf32>
    %cst = arith.constant dense<0.000000e+00> : vector<4x64xf32>
    %4 = tpu.matmul %3, %0, %cst {dimension_numbers = #tpu.dot_dimension_numbers<[1], [0], [0], [1], [0, 0, 1, 1], [], []>} : vector<4x16xf32>, vector<16x64xf32>, vector<4x64xf32> -> vector<4x64xf32>
    %c0_7 = arith.constant 0 : index
    %c0_8 = arith.constant 0 : index
    %5 = vector.load %arg3[%c0_7, %c0_8] : memref<1x64xf32, #tpu.memory_space<vmem>>, vector<1x64xf32>
    %6 = vector.broadcast %5 : vector<1x64xf32> to vector<4x64xf32>
    %7 = arith.addf %4, %6 : vector<4x64xf32>
    %cst_9 = arith.constant 0.000000e+00 : f32
    %8 = vector.broadcast %cst_9 : f32 to vector<4x64xf32>
    %9 = arith.maximumf %7, %8 : vector<4x64xf32>
    %cst_10 = arith.constant dense<0.000000e+00> : vector<4x64xf32>
    %10 = tpu.matmul %9, %1, %cst_10 {dimension_numbers = #tpu.dot_dimension_numbers<[1], [0], [0], [1], [0, 0, 1, 1], [], []>} : vector<4x64xf32>, vector<64x64xf32>, vector<4x64xf32> -> vector<4x64xf32>
    %c0_11 = arith.constant 0 : index
    %c0_12 = arith.constant 0 : index
    %11 = vector.load %arg5[%c0_11, %c0_12] : memref<1x64xf32, #tpu.memory_space<vmem>>, vector<1x64xf32>
    %12 = vector.broadcast %11 : vector<1x64xf32> to vector<4x64xf32>
    %13 = arith.addf %10, %12 : vector<4x64xf32>
    %cst_13 = arith.constant 0.000000e+00 : f32
    %14 = vector.broadcast %cst_13 : f32 to vector<4x64xf32>
    %15 = arith.maximumf %13, %14 : vector<4x64xf32>
    %cst_14 = arith.constant dense<0.000000e+00> : vector<4x8xf32>
    %16 = tpu.matmul %15, %2, %cst_14 {dimension_numbers = #tpu.dot_dimension_numbers<[1], [0], [0], [1], [0, 0, 1, 1], [], []>} : vector<4x64xf32>, vector<64x8xf32>, vector<4x8xf32> -> vector<4x8xf32>
    %c0_15 = arith.constant 0 : index
    %c0_16 = arith.constant 0 : index
    %17 = vector.load %arg7[%c0_15, %c0_16] : memref<1x8xf32, #tpu.memory_space<vmem>>, vector<1x8xf32>
    %18 = vector.broadcast %17 : vector<1x8xf32> to vector<4x8xf32>
    %19 = arith.addf %16, %18 : vector<4x8xf32>
    %c0_17 = arith.constant 0 : index
    %c0_18 = arith.constant 0 : index
    %20 = vector.load %arg8[%c0_17, %c0_18] : memref<4x8xf32, #tpu.memory_space<vmem>>, vector<4x8xf32>
    tpu.vector_store %arg8[%c0_17, %c0_18], %19 {strides = array<i32>} : memref<4x8xf32, #tpu.memory_space<vmem>>, vector<4x8xf32>,
    return
  }
  func.func @transform_0(%arg0: i32) -> (i32, i32) {
    %c0_i32 = arith.constant 0 : i32
    %c0_i32_0 = arith.constant 0 : i32
    return %arg0, %c0_i32 : i32, i32
  }
  func.func @transform_1(%arg0: i32) -> (i32, i32) {
    %c0_i32 = arith.constant 0 : i32
    %c0_i32_0 = arith.constant 0 : i32
    %c0_i32_1 = arith.constant 0 : i32
    return %c0_i32, %c0_i32_0 : i32, i32
  }
  func.func @transform_2(%arg0: i32) -> (i32, i32) {
    %c0_i32 = arith.constant 0 : i32
    %c0_i32_0 = arith.constant 0 : i32
    %c0_i32_1 = arith.constant 0 : i32
    return %c0_i32, %c0_i32_0 : i32, i32
  }
  func.func @transform_3(%arg0: i32) -> (i32, i32) {
    %c0_i32 = arith.constant 0 : i32
    %c0_i32_0 = arith.constant 0 : i32
    %c0_i32_1 = arith.constant 0 : i32
    return %c0_i32, %c0_i32_0 : i32, i32
  }
  func.func @transform_4(%arg0: i32) -> (i32, i32) {
    %c0_i32 = arith.constant 0 : i32
    %c0_i32_0 = arith.constant 0 : i32
    %c0_i32_1 = arith.constant 0 : i32
    return %c0_i32, %c0_i32_0 : i32, i32
  }
  func.func @transform_5(%arg0: i32) -> (i32, i32) {
    %c0_i32 = arith.constant 0 : i32
    %c0_i32_0 = arith.constant 0 : i32
    %c0_i32_1 = arith.constant 0 : i32
    return %c0_i32, %c0_i32_0 : i32, i32
  }
  func.func @transform_6(%arg0: i32) -> (i32, i32) {
    %c0_i32 = arith.constant 0 : i32
    %c0_i32_0 = arith.constant 0 : i32
    %c0_i32_1 = arith.constant 0 : i32
    return %c0_i32, %c0_i32_0 : i32, i32
  }
  func.func @transform_7(%arg0: i32) -> (i32, i32) {
    %c0_i32 = arith.constant 0 : i32
    %c0_i32_0 = arith.constant 0 : i32
    return %arg0, %c0_i32 : i32, i32
  }
}

</mosaic_0001>

<llo_original>
// kernel: tpu_custom_call.1
$region0: #{tpu_custom_call.1}
  #allocation0 [shape = 'u32[]', space=smem, size = 0x4, offset = 0x4, fixed_abs, tag = 'smem constant byte address 0x4 - core index']
  #allocation1 [shape = 'u32[144,128]{1,0:T(1,128)}', space=vmem, size = 0x12000, scoped, tag = 'internal scratch']
  %s0 = inlined_call_operand.vmem [shape: f32[4,16], index: 0, kind: input, shape index: {}]
  %s1 = inlined_call_operand.hbm [shape: f32[16,64], index: 1, kind: input, shape index: {}]
  %s2 = inlined_call_operand.vmem [shape: f32[1,64], index: 2, kind: input, shape index: {}]
  %s3 = inlined_call_operand.vmem [shape: f32[64,64], index: 3, kind: input, shape index: {}]
  %s4 = inlined_call_operand.vmem [shape: f32[1,64], index: 4, kind: input, shape index: {}]
  %s5 = inlined_call_operand.vmem [shape: f32[64,8], index: 5, kind: input, shape index: {}]
  %s6 = inlined_call_operand.vmem [shape: f32[1,8], index: 6, kind: input, shape index: {}]
  %s7 = inlined_call_operand.hbm [shape: f32[4,8], index: 7, kind: output, shape index: {}]
  %s8 = sld [smem:[#allocation0]]
  $region42: #{tpu_custom_call.1} parent=0
    _
  %s10 = ssub.s32 1, %s8
  %s11 = scalar_select 0, %s10, %s8
  $region1: #{tpu_custom_call.1} parent=0
    #allocation2 [shape = 'u8[8192]{0}', space=vmem, size = 0x2000, scoped, tag = 'input window, operand 1, single buffered']
    #allocation3 [shape = 's32[1]{0}', space=sflag, size = 0x4, scoped, tag = 'scoped memory for tpu_custom_call.1']
    #allocation4 [shape = 's32[1]{0}', space=sflag, size = 0x4, scoped, tag = 'scoped memory for tpu_custom_call.1']
    #allocation5 [shape = 'u8[2048]{0}', space=vmem, size = 0x800, scoped, tag = 'output window, operand 0, single buffered']
    %12 = vsyncpa [#allocation3], 0
    %13 = vsyncpa [#allocation4], 0
    // Predicated region
    $region2: #{tpu_custom_call.1} parent=1 // pred_check
      _
    $region3: #{tpu_custom_call.1} parent=1 // pred_check_branch
      %15 = sbr.rel (0) target = $region5
    $region4: #{tpu_custom_call.1} parent=1 // pred_region
      _
    $region5: #{tpu_custom_call.1} parent=1 // pred_fallthru
      _
    // Predicated region
    $region6: #{tpu_custom_call.1} parent=1 // pred_check
      _
    $region7: #{tpu_custom_call.1} parent=1 // pred_check_branch
      %17 = sbr.rel (0) target = $region9
    $region8: #{tpu_custom_call.1} parent=1 // pred_region
      %s19 = ssub.s32 256, 256
      %20 = vsyncadd [#allocation3], %s19
      %s21 = sshll.u32 [#allocation2], 4
      %s22 = int_to_ptr.vmem [resolvable:$true] %s21
      %27 = dma.hbm_to_vmem [thread:$0]  %s1, 256, %s22, [#allocation3], 128, 128, 8
    $region9: #{tpu_custom_call.1} parent=1 // pred_fallthru
      _
    // Predicated region
    $region10: #{tpu_custom_call.1} parent=1 // pred_check
      _
    $region11: #{tpu_custom_call.1} parent=1 // pred_check_branch
      %29 = sbr.rel (0) target = $region13
    $region12: #{tpu_custom_call.1} parent=1 // pred_region
      _
    $region13: #{tpu_custom_call.1} parent=1 // pred_fallthru
      _
    // Predicated region
    $region14: #{tpu_custom_call.1} parent=1 // pred_check
      _
    $region15: #{tpu_custom_call.1} parent=1 // pred_check_branch
      %31 = sbr.rel (0) target = $region17
    $region16: #{tpu_custom_call.1} parent=1 // pred_region
      _
    $region17: #{tpu_custom_call.1} parent=1 // pred_fallthru
      _
    // Predicated region
    $region18: #{tpu_custom_call.1} parent=1 // pred_check
      _
    $region19: #{tpu_custom_call.1} parent=1 // pred_check_branch
      %33 = sbr.rel (0) target = $region21
    $region20: #{tpu_custom_call.1} parent=1 // pred_region
      _
    $region21: #{tpu_custom_call.1} parent=1 // pred_fallthru
      _
    // Predicated region
    $region22: #{tpu_custom_call.1} parent=1 // pred_check
      _
    $region23: #{tpu_custom_call.1} parent=1 // pred_check_branch
      %35 = sbr.rel (0) target = $region25
    $region24: #{tpu_custom_call.1} parent=1 // pred_region
      _
    $region25: #{tpu_custom_call.1} parent=1 // pred_fallthru
      _
    // Predicated region
    $region26: #{tpu_custom_call.1} parent=1 // pred_check
      _
    $region27: #{tpu_custom_call.1} parent=1 // pred_check_branch
      %37 = sbr.rel (0) target = $region29
    $region28: #{tpu_custom_call.1} parent=1 // pred_region
      _
    $region29: #{tpu_custom_call.1} parent=1 // pred_fallthru
      _
    // Predicated region
    $region30: #{tpu_custom_call.1} parent=1 // pred_check
      _
    $region31: #{tpu_custom_call.1} parent=1 // pred_check_branch
      %39 = sbr.rel (0) target = $region33
    $region32: #{tpu_custom_call.1} parent=1 // pred_region
      %40 = dma.done [#allocation3], 256
    $region33: #{tpu_custom_call.1} parent=1 // pred_fallthru
      _
    %v41 = vld [vmem:[#allocation2] sm:$0xff]
    %v42 = vld [vmem:[#allocation2 + $0x8] sm:$0xff]
    %v43 = vld [vmem:[%s3] sm:$0xff]
    %v44 = vld [vmem:[%s3 + $0x8] sm:$0xff]
    %v45 = vld [vmem:[%s3 + $0x10] sm:$0xff]
    %v46 = vld [vmem:[%s3 + $0x18] sm:$0xff]
    %v47 = vld [vmem:[%s3 + $0x20] sm:$0xff]
    %v48 = vld [vmem:[%s3 + $0x28] sm:$0xff]
    %v49 = vld [vmem:[%s3 + $0x30] sm:$0xff]
    %v50 = vld [vmem:[%s3 + $0x38] sm:$0xff]
    %v51 = vld [vmem:[%s5] sm:$0xff]
    %v52 = vld [vmem:[%s5 + $0x8] sm:$0xff]
    %v53 = vld [vmem:[%s5 + $0x10] sm:$0xff]
    %v54 = vld [vmem:[%s5 + $0x18] sm:$0xff]
    %v55 = vld [vmem:[%s5 + $0x20] sm:$0xff]
    %v56 = vld [vmem:[%s5 + $0x28] sm:$0xff]
    %v57 = vld [vmem:[%s5 + $0x30] sm:$0xff]
    %v58 = vld [vmem:[%s5 + $0x38] sm:$0xff]
    %v59 = vld [vmem:[%s0] sm:$0xf]
    %v60 = vld [vmem:[%s2] sm:$0x1]
    %v62 = vlaneseq
    %v63 = vshrl.u32 %v62, 7
    %v64 = vsub.s32 0, %v63
    %v65 = vrot.slane %v60, %v64
    %vm67 = vcmask 130048
    %v69 = vsel %vm67, %v59, 0
    %71 = vmatprep.subr.mxu0 0.0
    %72 = vmatpush1.msra.mxu0 0.0
    %73 = vmatprep.subr.mxu0 0.0
    %74 = vmatpush1.msra.mxu0 0.0
    %75 = vmatprep.subr.mxu0 0.0
    %76 = vmatpush1.msra.mxu0 0.0
    %77 = vmatprep.subr.mxu0 0.0
    %78 = vmatpush1.msra.mxu0 0.0
    %79 = vmatprep.subr.mxu0 0.0
    %80 = vmatpush1.msra.mxu0 0.0
    %81 = vmatprep.subr.mxu0 0.0
    %82 = vmatpush1.msra.mxu0 0.0
    %83 = vmatprep.subr.mxu0 0.0
    %84 = vmatpush1.msra.mxu0 0.0
    %85 = vmatprep.subr.mxu0 0.0
    %86 = vmatpush1.msra.mxu0 0.0
    %87 = vmatprep.subr.mxu0 0.0
    %88 = vmatpush1.msra.mxu0 0.0
    %89 = vmatprep.subr.mxu0 0.0
    %90 = vmatpush1.msra.mxu0 0.0
    %91 = vmatprep.subr.mxu0 0.0
    %92 = vmatpush1.msra.mxu0 0.0
    %93 = vmatprep.subr.mxu0 0.0
    %94 = vmatpush1.msra.mxu0 0.0
    %95 = vmatprep.subr.mxu0 0.0
    %96 = vmatpush1.msra.mxu0 0.0
    %97 = vmatprep.subr.mxu0 0.0
    %98 = vmatpush1.msra.mxu0 0.0
    %99 = vmatprep.subr.mxu0 0.0
    %100 = vmatpush1.msra.mxu0 %v42
    %101 = vmatprep.subr.mxu0 0.0
    %102 = vmatpush1.msra.mxu0 %v41
    %103 = vmatprep.subr.mxu0 0.0
    %104 = vmatpush2.msra.mxu0 0.0
    %105 = vmatprep.subr.mxu0 0.0
    %106 = vmatpush2.msra.mxu0 0.0
    %107 = vmatprep.subr.mxu0 0.0
    %108 = vmatpush2.msra.mxu0 0.0
    %109 = vmatprep.subr.mxu0 0.0
    %110 = vmatpush2.msra.mxu0 0.0
    %111 = vmatprep.subr.mxu0 0.0
    %112 = vmatpush2.msra.mxu0 0.0
    %113 = vmatprep.subr.mxu0 0.0
    %114 = vmatpush2.msra.mxu0 0.0
    %115 = vmatprep.subr.mxu0 0.0
    %116 = vmatpush2.msra.mxu0 0.0
    %117 = vmatprep.subr.mxu0 0.0
    %118 = vmatpush2.msra.mxu0 0.0
    %119 = vmatprep.subr.mxu0 0.0
    %120 = vmatpush2.msra.mxu0 0.0
    %121 = vmatprep.subr.mxu0 0.0
    %122 = vmatpush2.msra.mxu0 0.0
    %123 = vmatprep.subr.mxu0 0.0
    %124 = vmatpush2.msra.mxu0 0.0
    %125 = vmatprep.subr.mxu0 0.0
    %126 = vmatpush2.msra.mxu0 0.0
    %127 = vmatprep.subr.mxu0 0.0
    %128 = vmatpush2.msra.mxu0 0.0
    %129 = vmatprep.subr.mxu0 0.0
    %130 = vmatpush2.msra.mxu0 0.0
    %131 = vmatprep.subr.mxu0 0.0
    %132 = vmatpush2.msra.mxu0 0.0
    %133 = vmatprep.subr.mxu0 0.0
    %134 = vmatpush2.msra.mxu0 0.0
    %135 = vmatprep.mubr.f32.mxu0 0.0
    %136 = vmatmul.mubr.f32.gmra.mxu0 %v69
    %v137 = vpop.f32.mrf.mxu0
    %v138 = vadd.f32 %v65, %v137
    %v139 = vpop.f32.mrf.mxu0
    %140 = vdwg.mxu0
    %v141 = vmax.f32 %v138, 0.0
    %v142 = vld [vmem:[%s4] sm:$0x1]
    %v144 = vlaneseq
    %v145 = vshrl.u32 %v144, 7
    %v146 = vsub.s32 0, %v145
    %v147 = vrot.slane %v142, %v146
    %vm149 = vcmask 523264
    %v151 = vsel %vm149, %v141, 0
    %153 = vmatprep.subr.mxu0 0.0
    %154 = vmatpush1.msra.mxu0 0.0
    %155 = vmatprep.subr.mxu0 0.0
    %156 = vmatpush1.msra.mxu0 0.0
    %157 = vmatprep.subr.mxu0 0.0
    %158 = vmatpush1.msra.mxu0 0.0
    %159 = vmatprep.subr.mxu0 0.0
    %160 = vmatpush1.msra.mxu0 0.0
    %161 = vmatprep.subr.mxu0 0.0
    %162 = vmatpush1.msra.mxu0 0.0
    %163 = vmatprep.subr.mxu0 0.0
    %164 = vmatpush1.msra.mxu0 0.0
    %165 = vmatprep.subr.mxu0 0.0
    %166 = vmatpush1.msra.mxu0 0.0
    %167 = vmatprep.subr.mxu0 0.0
    %168 = vmatpush1.msra.mxu0 0.0
    %169 = vmatprep.subr.mxu0 0.0
    %170 = vmatpush1.msra.mxu0 %v50
    %171 = vmatprep.subr.mxu0 0.0
    %172 = vmatpush1.msra.mxu0 %v49
    %173 = vmatprep.subr.mxu0 0.0
    %174 = vmatpush1.msra.mxu0 %v48
    %175 = vmatprep.subr.mxu0 0.0
    %176 = vmatpush1.msra.mxu0 %v47
    %177 = vmatprep.subr.mxu0 0.0
    %178 = vmatpush1.msra.mxu0 %v46
    %179 = vmatprep.subr.mxu0 0.0
    %180 = vmatpush1.msra.mxu0 %v45
    %181 = vmatprep.subr.mxu0 0.0
    %182 = vmatpush1.msra.mxu0 %v44
    %183 = vmatprep.subr.mxu0 0.0
    %184 = vmatpush1.msra.mxu0 %v43
    %185 = vmatprep.subr.mxu0 0.0
    %186 = vmatpush2.msra.mxu0 0.0
    %187 = vmatprep.subr.mxu0 0.0
    %188 = vmatpush2.msra.mxu0 0.0
    %189 = vmatprep.subr.mxu0 0.0
    %190 = vmatpush2.msra.mxu0 0.0
    %191 = vmatprep.subr.mxu0 0.0
    %192 = vmatpush2.msra.mxu0 0.0
    %193 = vmatprep.subr.mxu0 0.0
    %194 = vmatpush2.msra.mxu0 0.0
    %195 = vmatprep.subr.mxu0 0.0
    %196 = vmatpush2.msra.mxu0 0.0
    %197 = vmatprep.subr.mxu0 0.0
    %198 = vmatpush2.msra.mxu0 0.0
    %199 = vmatprep.subr.mxu0 0.0
    %200 = vmatpush2.msra.mxu0 0.0
    %201 = vmatprep.subr.mxu0 0.0
    %202 = vmatpush2.msra.mxu0 0.0
    %203 = vmatprep.subr.mxu0 0.0
    %204 = vmatpush2.msra.mxu0 0.0
    %205 = vmatprep.subr.mxu0 0.0
    %206 = vmatpush2.msra.mxu0 0.0
    %207 = vmatprep.subr.mxu0 0.0
    %208 = vmatpush2.msra.mxu0 0.0
    %209 = vmatprep.subr.mxu0 0.0
    %210 = vmatpush2.msra.mxu0 0.0
    %211 = vmatprep.subr.mxu0 0.0
    %212 = vmatpush2.msra.mxu0 0.0
    %213 = vmatprep.subr.mxu0 0.0
    %214 = vmatpush2.msra.mxu0 0.0
    %215 = vmatprep.subr.mxu0 0.0
    %216 = vmatpush2.msra.mxu0 0.0
    %217 = vmatprep.mubr.f32.mxu0 0.0
    %218 = vmatmul.mubr.f32.gmra.mxu0 %v151
    %v219 = vpop.f32.mrf.mxu0
    %v220 = vadd.f32 %v147, %v219
    %v221 = vpop.f32.mrf.mxu0
    %222 = vdwg.mxu0
    %v223 = vmax.f32 %v220, 0.0
    %v224 = vld [vmem:[%s6] sm:$0x1]
    %v226 = vlaneseq
    %v227 = vshrl.u32 %v226, 7
    %v228 = vsub.s32 0, %v227
    %v229 = vrot.slane %v224, %v228
    %v232 = vsel %vm149, %v223, 0
    %234 = vmatprep.subr.mxu0 0.0
    %235 = vmatpush1.msra.mxu0 0.0
    %236 = vmatprep.subr.mxu0 0.0
    %237 = vmatpush1.msra.mxu0 0.0
    %238 = vmatprep.subr.mxu0 0.0
    %239 = vmatpush1.msra.mxu0 0.0
    %240 = vmatprep.subr.mxu0 0.0
    %241 = vmatpush1.msra.mxu0 0.0
    %242 = vmatprep.subr.mxu0 0.0
    %243 = vmatpush1.msra.mxu0 0.0
    %244 = vmatprep.subr.mxu0 0.0
    %245 = vmatpush1.msra.mxu0 0.0
    %246 = vmatprep.subr.mxu0 0.0
    %247 = vmatpush1.msra.mxu0 0.0
    %248 = vmatprep.subr.mxu0 0.0
    %249 = vmatpush1.msra.mxu0 0.0
    %250 = vmatprep.subr.mxu0 0.0
    %251 = vmatpush1.msra.mxu0 %v58
    %252 = vmatprep.subr.mxu0 0.0
    %253 = vmatpush1.msra.mxu0 %v57
    %254 = vmatprep.subr.mxu0 0.0
    %255 = vmatpush1.msra.mxu0 %v56
    %256 = vmatprep.subr.mxu0 0.0
    %257 = vmatpush1.msra.mxu0 %v55
    %258 = vmatprep.subr.mxu0 0.0
    %259 = vmatpush1.msra.mxu0 %v54
    %260 = vmatprep.subr.mxu0 0.0
    %261 = vmatpush1.msra.mxu0 %v53
    %262 = vmatprep.subr.mxu0 0.0
    %263 = vmatpush1.msra.mxu0 %v52
    %264 = vmatprep.subr.mxu0 0.0
    %265 = vmatpush1.msra.mxu0 %v51
    %266 = vmatprep.subr.mxu0 0.0
    %267 = vmatpush2.msra.mxu0 0.0
    %268 = vmatprep.subr.mxu0 0.0
    %269 = vmatpush2.msra.mxu0 0.0
    %270 = vmatprep.subr.mxu0 0.0
    %271 = vmatpush2.msra.mxu0 0.0
    %272 = vmatprep.subr.mxu0 0.0
    %273 = vmatpush2.msra.mxu0 0.0
    %274 = vmatprep.subr.mxu0 0.0
    %275 = vmatpush2.msra.mxu0 0.0
    %276 = vmatprep.subr.mxu0 0.0
    %277 = vmatpush2.msra.mxu0 0.0
    %278 = vmatprep.subr.mxu0 0.0
    %279 = vmatpush2.msra.mxu0 0.0
    %280 = vmatprep.subr.mxu0 0.0
    %281 = vmatpush2.msra.mxu0 0.0
    %282 = vmatprep.subr.mxu0 0.0
    %283 = vmatpush2.msra.mxu0 0.0
    %284 = vmatprep.subr.mxu0 0.0
    %285 = vmatpush2.msra.mxu0 0.0
    %286 = vmatprep.subr.mxu0 0.0
    %287 = vmatpush2.msra.mxu0 0.0
    %288 = vmatprep.subr.mxu0 0.0
    %289 = vmatpush2.msra.mxu0 0.0
    %290 = vmatprep.subr.mxu0 0.0
    %291 = vmatpush2.msra.mxu0 0.0
    %292 = vmatprep.subr.mxu0 0.0
    %293 = vmatpush2.msra.mxu0 0.0
    %294 = vmatprep.subr.mxu0 0.0
    %295 = vmatpush2.msra.mxu0 0.0
    %296 = vmatprep.subr.mxu0 0.0
    %297 = vmatpush2.msra.mxu0 0.0
    %298 = vmatprep.mubr.f32.mxu0 0.0
    %299 = vmatmul.mubr.f32.gmra.mxu0 %v232
    %v300 = vpop.f32.mrf.mxu0
    %v301 = vadd.f32 %v229, %v300
    %v302 = vpop.f32.mrf.mxu0
    %303 = vdwg.mxu0
    %vm304 = vcmask 60416
    %305 = vst.msk [vmem:[#allocation5] sm:$0xf] %vm304, %v301
    // Predicated region
    $region34: #{tpu_custom_call.1} parent=1 // pred_check
      _
    $region35: #{tpu_custom_call.1} parent=1 // pred_check_branch
      %307 = sbr.rel (0) target = $region37
    $region36: #{tpu_custom_call.1} parent=1 // pred_region
      %s309 = ssub.s32 64, 64
      %310 = vsyncadd [#allocation4], %s309
      %s312 = sshll.u32 [#allocation5], 4
      %s313 = int_to_ptr.vmem [resolvable:$true] %s312
      %315 = dma.vmem_to_hbm [thread:$0]  %s313, 64, %s7, [#allocation4]
    $region37: #{tpu_custom_call.1} parent=1 // pred_fallthru
      _
    // Predicated region
    $region38: #{tpu_custom_call.1} parent=1 // pred_check
      _
    $region39: #{tpu_custom_call.1} parent=1 // pred_check_branch
      %317 = sbr.rel (0) target = $region41
    $region40: #{tpu_custom_call.1} parent=1 // pred_region
      %318 = dma.done [#allocation4], 64
    $region41: #{tpu_custom_call.1} parent=1 // pred_fallthru
      _
    %319 = vsyncpa [#allocation3], 1
    %320 = vsyncpa [#allocation4], 1

</llo_original>
